<compile_context>
chip_gen: v7x
topology: tpu7x:2x2x1
jax: 0.10.0
libtpu: 0.0.40
codegen_flags: <defaults>
</compile_context>

<pallas_src>
import functools

import jax
import jax.numpy as jnp
from jax.experimental import pallas as pl
from jax.experimental.pallas import tpu as pltpu

_EPS = 1e-8
_LANE = 128


# ----------------------------- in-kernel math ------------------------------ #
# All helpers operate on per-channel (S, 128) float32 slabs of one image.

def _adjust_contrast(r, g, b, fc, inv_hw):
    # torch: clamp((x - mean) * fc + mean, 0, 1) == clamp(x*fc + mean*(1-fc), 0, 1)
    # mean = sum / true_HW (zero padding does not perturb the sum).
    one_m_fc = 1.0 - fc
    mr = jnp.sum(r, keepdims=True) * inv_hw          # (1, 1)
    mg = jnp.sum(g, keepdims=True) * inv_hw
    mb = jnp.sum(b, keepdims=True) * inv_hw
    r = jnp.clip(r * fc + mr * one_m_fc, 0.0, 1.0)
    g = jnp.clip(g * fc + mg * one_m_fc, 0.0, 1.0)
    b = jnp.clip(b * fc + mb * one_m_fc, 0.0, 1.0)
    return r, g, b


def _rgb_to_adjusted_hsv(r, g, b, fb, fh, fs):
    # rgb2hsv fused with brightness / hue / saturate.  The torch whole-tensor
    # re-clamps in adjust_brightness / adjust_saturate are no-ops (h, s, v are
    # already in [0, 1]) and are dropped.
    cmax = jnp.maximum(jnp.maximum(r, g), b)
    cmin = jnp.minimum(jnp.minimum(r, g), b)
    delta = cmax - cmin
    inv_delta = pl.reciprocal(delta + _EPS, approx=True)   # EUP slot, ~free
    # On the selected (cmax==r) branch (g-b)/delta is in [-1, 1], so the torch
    # `% 6` collapses to a single select (saves a div/floor/mul).
    hue_r = (g - b) * inv_delta
    hue_r = jnp.where(hue_r < 0.0, hue_r + 6.0, hue_r)
    hue_g = (b - r) * inv_delta + 2.0
    hue_b = (r - g) * inv_delta + 4.0
    # torch writes r-branch, then g, then b (last write wins), then Cmax==0 -> 0
    hue = jnp.where(cmax == r, hue_r, 0.0)
    hue = jnp.where(cmax == g, hue_g, hue)
    hue = jnp.where(cmax == b, hue_b, hue)
    hue = jnp.where(cmax == 0.0, 0.0, hue)
    h = hue * (1.0 / 6.0)
    s = jnp.where(cmax == 0.0, 0.0,
                  delta * pl.reciprocal(cmax + _EPS, approx=True))
    v = cmax
    # adjust_brightness / adjust_hue / adjust_saturate (independent channels)
    v = jnp.clip(v * fb, 0.0, 1.0)
    hh = h + fh * (255.0 / 360.0)          # in (-0.36, 1.36)
    h = hh - jnp.floor(hh)                 # == mod 1, cheaper
    s = jnp.clip(s * fs, 0.0, 1.0)
    return h, s, v


def _hsv_to_rgb(h, s, v):
    # Compact, gap-free hsv->rgb: chan = v - c*clamp(min(k, 4-k), 0, 1).
    # TODO(synk): torch's half-open sector cascade maps hue == 1.0 exactly (a
    # degenerate mod residue) to gray; this formula wraps it to hue == 0.
    c = v * s
    h6 = h * 6.0                           # in [0, 6)

    def chan(n):
        k = n + h6                         # in [n, n+6) -> one select replaces mod 6
        k = jnp.where(k >= 6.0, k - 6.0, k)
        val = v - c * jnp.clip(jnp.minimum(k, 4.0 - k), 0.0, 1.0)
        # Final clamp matches torch's hsv2rgb `clamp(rgb, 0, 1)` and keeps the
        # strict [0, 1] postcondition (cheap: 2 VALU ops/channel).
        return jnp.minimum(jnp.maximum(val, 0.0), 1.0)

    return chan(5.0), chan(3.0), chan(1.0)


# --------------------------------- kernel ---------------------------------- #
def _color_jitter_kernel(fac_ref, x_ref, o_ref, *, tb, inv_hw, contrast_first):
    # fac_ref: (4, B_pad) SMEM  [contrast, brightness, hue, saturate]
    # x_ref / o_ref: (tb, 3, S, 128) VMEM
    base = pl.program_id(0) * tb

    def one_image(t):
        idx = base + t
        fc = fac_ref[0, idx]
        fb = fac_ref[1, idx]
        fh = fac_ref[2, idx]
        fs = fac_ref[3, idx]

        r = x_ref[t, 0]                    # (S, 128) sublane/lane-dense
        g = x_ref[t, 1]
        b = x_ref[t, 2]

        if contrast_first:
            r, g, b = _adjust_contrast(r, g, b, fc, inv_hw)
        h, s, v = _rgb_to_adjusted_hsv(r, g, b, fb, fh, fs)
        r, g, b = _hsv_to_rgb(h, s, v)
        if not contrast_first:
            r, g, b = _adjust_contrast(r, g, b, fc, inv_hw)

        o_ref[t, 0] = r
        o_ref[t, 1] = g
        o_ref[t, 2] = b

    if tb <= 4:
        # short fixed trip-count: static unroll keeps scheduler visibility
        for t in range(tb):
            one_image(t)
    else:
        # fori_loop bounds the live vreg set to ~one image and avoids the
        # register-spill blow-up a big static unroll would cause.
        def body(t, carry):
            one_image(t)
            return carry
        jax.lax.fori_loop(0, tb, body, 0)


# --------------------------------- wrapper ---------------------------------- #
def _target_block_bytes():
    # Generation-aware block target: ~1/16 of physical VMEM per buffer so
    # 2x(in) + 2x(out) double-buffers sit at ~1/4 of VMEM on every chip
    # (v5e/v6e 128 MiB -> 8 MiB blocks, v7x 64 MiB -> 4 MiB blocks).
    vmem_cap = 64 << 20                    # conservative default (v7x per-TC)
    try:
        info = pltpu.get_tpu_info()
        vmem_cap = int(getattr(info, "vmem_capacity_bytes", vmem_cap))
    except Exception:
        pass
    return int(min(8 << 20, max(1 << 20, vmem_cap // 16)))


def _plan_batch_tiling(batch, bytes_per_image, target_bytes):
    """Returns (tb images/block, grid steps, padded batch = tb*steps)."""
    tb = max(1, min(batch, target_bytes // max(bytes_per_image, 1)))
    steps = pl.cdiv(batch, tb)
    if batch >= 2:
        steps = max(steps, 2)              # let both v7x TensorCores see work
        if steps % 2:
            steps += 1                     # even split across the 2 cores
    tb = pl.cdiv(batch, steps)             # shrinks only; still <= target
    return tb, steps, steps * tb


def color_jitter_forward(x_nchw, factor_contrast, factor_brightness,
                         factor_hue, factor_saturate, *, contrast_first=True):
    """x_nchw: (B, 3, H, W) float32 in [0, 1]; factors: (B,) float32 each."""
    B, C, H, W = x_nchw.shape
    assert C == 3, "ColorJitterLayer operates on RGB images (C == 3)"
    HW = H * W
    S = pl.cdiv(HW, _LANE)
    HW_pad = S * _LANE

    x = x_nchw.reshape(B, C, HW)
    if HW_pad != HW:
        # TODO(synk): ragged H*W pays an extra pad (and slice-back) HBM pass;
        # the lane-dense repack is free only when H*W % 128 == 0 (e.g. 64x64).
        x = jnp.pad(x, ((0, 0), (0, 0), (0, HW_pad - HW)))   # zeros -> mean safe
    x = x.reshape(B, C, S, _LANE)                             # lane-dense layout

    bytes_per_image = C * HW_pad * 4
    tb, steps, b_pad = _plan_batch_tiling(B, bytes_per_image,
                                          _target_block_bytes())
    if b_pad != B:
        x = jnp.pad(x, ((0, b_pad - B), (0, 0), (0, 0), (0, 0)))

    # Pack the 4 per-image factors into one (4, B_pad) SMEM operand.
    factors = jnp.stack([factor_contrast, factor_brightness,
                         factor_hue, factor_saturate]).astype(jnp.float32)
    if b_pad != B:
        factors = jnp.pad(factors, ((0, 0), (0, b_pad - B)),
                          constant_values=1.0)

    block_bytes = tb * bytes_per_image
    # 2x(in) + 2x(out) double-buffers plus headroom for compiler scratch.
    vmem_limit = max(16 << 20, 4 * block_bytes + (4 << 20))

    kernel = functools.partial(_color_jitter_kernel, tb=tb, inv_hw=1.0 / HW,
                               contrast_first=contrast_first)
    img_spec = pl.BlockSpec((tb, C, S, _LANE), lambda i: (i, 0, 0, 0))

    out = pl.pallas_call(
        kernel,
        out_shape=jax.ShapeDtypeStruct((b_pad, C, S, _LANE), x.dtype),
        grid=(steps,),
        in_specs=[
            pl.BlockSpec(memory_space=pltpu.MemorySpace.SMEM),   # packed factors
            img_spec,
        ],
        out_specs=img_spec,
        compiler_params=pltpu.CompilerParams(
            dimension_semantics=("parallel",),
            vmem_limit_bytes=int(vmem_limit)),
    )(factors, x)

    out = out[:B].reshape(B, C, HW_pad)[:, :, :HW]
    return out.reshape(B, C, H, W)


# ------------------------- parameter initialization ------------------------- #
def init_factors(key, batch_size, stack_size=1,
                 brightness=0.4, contrast=0.4, saturation=0.4, hue=0.5):
    # ranges as produced by ColorJitterLayer._check_input
    c_lo, c_hi = max(1 - contrast, 0.0), 1 + contrast        # (0.6, 1.4)
    b_lo, b_hi = max(1 - brightness, 0.0), 1 + brightness    # (0.6, 1.4)
    s_lo, s_hi = max(1 - saturation, 0.0), 1 + saturation    # (0.6, 1.4)
    h_lo, h_hi = -hue, hue                                   # (-0.5, 0.5)
    kc, kb, kh, ks = jax.random.split(key, 4)

    def draw(k, lo, hi):
        f = jax.random.uniform(k, (batch_size,), jnp.float32,
                               minval=lo, maxval=hi)
        return jnp.repeat(f, stack_size)                     # per-stack repeat

    return (draw(kc, c_lo, c_hi), draw(kb, b_lo, b_hi),
            draw(kh, h_lo, h_hi), draw(ks, s_lo, s_hi))


if __name__ == "__main__":
    batch_size, stack_size = 2, 1
    B = batch_size * stack_size
    C, H, W = 3, 16, 16

    key = jax.random.PRNGKey(0)
    k_x, k_f = jax.random.split(key)
    # deterministic example input: RGB image batch, values in [0, 1]
    x = jax.random.uniform(k_x, (B, C, H, W), jnp.float32)

    fc, fb, fh, fs = init_factors(k_f, batch_size, stack_size)

    out = color_jitter_forward(x, fc, fb, fh, fs, contrast_first=True)
    out = jax.block_until_ready(out)

    assert out.shape == (B, C, H, W)
    assert out.dtype == jnp.float32
    assert bool(jnp.all(jnp.isfinite(out)))
    assert bool(jnp.all((out >= 0.0) & (out <= 1.0)))
    print("KERNEL_OK")
</pallas_src>

<mosaic_0001>
module attributes {stable_mosaic.version = 11 : i64} {
  func.func @_color_jitter_kernel(%arg0: i32, %arg1: memref<4x2xf32, #tpu.memory_space<smem>>, %arg2: memref<1x3x2x128xf32, #tpu.memory_space<vmem>>, %arg3: memref<1x3x2x128xf32, #tpu.memory_space<vmem>>) attributes {dimension_semantics = [#tpu.dimension_semantics<parallel>], iteration_bounds = array<i64: 2>, scalar_prefetch = 0 : i64, scratch_operands = 0 : i64, tpu.core_type = #tpu.core_type<tc>, window_params = [{transform_indices = @transform_0, window_bounds = array<i64: 4, 2>}, {transform_indices = @transform_1, window_bounds = array<i64: 1, 3, 2, 128>}, {transform_indices = @transform_2, window_bounds = array<i64: 1, 3, 2, 128>}]} {
    %c1_i32 = arith.constant 1 : i32
    %0 = arith.muli %arg0, %c1_i32 : i32
    %c0_i32 = arith.constant 0 : i32
    %1 = arith.addi %0, %c0_i32 : i32
    %c0 = arith.constant 0 : index
    %2 = arith.index_cast %1 : i32 to index
    %3 = memref.load %arg1[%c0, %2] : memref<4x2xf32, #tpu.memory_space<smem>>
    %c1 = arith.constant 1 : index
    %4 = arith.index_cast %1 : i32 to index
    %5 = memref.load %arg1[%c1, %4] : memref<4x2xf32, #tpu.memory_space<smem>>
    %c2 = arith.constant 2 : index
    %6 = arith.index_cast %1 : i32 to index
    %7 = memref.load %arg1[%c2, %6] : memref<4x2xf32, #tpu.memory_space<smem>>
    %c3 = arith.constant 3 : index
    %8 = arith.index_cast %1 : i32 to index
    %9 = memref.load %arg1[%c3, %8] : memref<4x2xf32, #tpu.memory_space<smem>>
    %c0_0 = arith.constant 0 : index
    %c0_1 = arith.constant 0 : index
    %c0_2 = arith.constant 0 : index
    %c0_3 = arith.constant 0 : index
    %10 = vector.load %arg2[%c0_0, %c0_1, %c0_2, %c0_3] : memref<1x3x2x128xf32, #tpu.memory_space<vmem>>, vector<1x1x2x128xf32>
    %11 = vector.shape_cast %10 : vector<1x1x2x128xf32> to vector<2x128xf32>
    %c0_4 = arith.constant 0 : index
    %c1_5 = arith.constant 1 : index
    %c0_6 = arith.constant 0 : index
    %c0_7 = arith.constant 0 : index
    %12 = vector.load %arg2[%c0_4, %c1_5, %c0_6, %c0_7] : memref<1x3x2x128xf32, #tpu.memory_space<vmem>>, vector<1x1x2x128xf32>
    %13 = vector.shape_cast %12 : vector<1x1x2x128xf32> to vector<2x128xf32>
    %c0_8 = arith.constant 0 : index
    %c2_9 = arith.constant 2 : index
    %c0_10 = arith.constant 0 : index
    %c0_11 = arith.constant 0 : index
    %14 = vector.load %arg2[%c0_8, %c2_9, %c0_10, %c0_11] : memref<1x3x2x128xf32, #tpu.memory_space<vmem>>, vector<1x1x2x128xf32>
    %15 = vector.shape_cast %14 : vector<1x1x2x128xf32> to vector<2x128xf32>
    %cst = arith.constant 1.000000e+00 : f32
    %16 = arith.subf %cst, %3 : f32
    %17 = vector.shape_cast %11 : vector<2x128xf32> to vector<1x2x128xf32>
    %cst_12 = arith.constant dense<0.000000e+00> : vector<1xf32>
    %18 = vector.multi_reduction <add>, %17, %cst_12 [1, 2] : vector<1x2x128xf32> to vector<1xf32>
    %19 = vector.shape_cast %18 : vector<1xf32> to vector<1x1x1xf32>
    %20 = vector.extract %19[0, 0, 0] : f32 from vector<1x1x1xf32>
    %21 = vector.broadcast %20 : f32 to vector<1x1xf32>
    %cst_13 = arith.constant 3.906250e-03 : f32
    %22 = vector.broadcast %cst_13 : f32 to vector<1x1xf32>
    %23 = arith.mulf %21, %22 : vector<1x1xf32>
    %24 = vector.shape_cast %13 : vector<2x128xf32> to vector<1x2x128xf32>
    %cst_14 = arith.constant dense<0.000000e+00> : vector<1xf32>
    %25 = vector.multi_reduction <add>, %24, %cst_14 [1, 2] : vector<1x2x128xf32> to vector<1xf32>
    %26 = vector.shape_cast %25 : vector<1xf32> to vector<1x1x1xf32>
    %27 = vector.extract %26[0, 0, 0] : f32 from vector<1x1x1xf32>
    %28 = vector.broadcast %27 : f32 to vector<1x1xf32>
    %cst_15 = arith.constant 3.906250e-03 : f32
    %29 = vector.broadcast %cst_15 : f32 to vector<1x1xf32>
    %30 = arith.mulf %28, %29 : vector<1x1xf32>
    %31 = vector.shape_cast %15 : vector<2x128xf32> to vector<1x2x128xf32>
    %cst_16 = arith.constant dense<0.000000e+00> : vector<1xf32>
    %32 = vector.multi_reduction <add>, %31, %cst_16 [1, 2] : vector<1x2x128xf32> to vector<1xf32>
    %33 = vector.shape_cast %32 : vector<1xf32> to vector<1x1x1xf32>
    %34 = vector.extract %33[0, 0, 0] : f32 from vector<1x1x1xf32>
    %35 = vector.broadcast %34 : f32 to vector<1x1xf32>
    %cst_17 = arith.constant 3.906250e-03 : f32
    %36 = vector.broadcast %cst_17 : f32 to vector<1x1xf32>
    %37 = arith.mulf %35, %36 : vector<1x1xf32>
    %38 = vector.broadcast %3 : f32 to vector<2x128xf32>
    %39 = arith.mulf %11, %38 : vector<2x128xf32>
    %40 = vector.broadcast %16 : f32 to vector<1x1xf32>
    %41 = arith.mulf %23, %40 : vector<1x1xf32>
    %42 = vector.broadcast %41 : vector<1x1xf32> to vector<2x128xf32>
    %43 = arith.addf %39, %42 : vector<2x128xf32>
    %cst_18 = arith.constant 0.000000e+00 : f32
    %cst_19 = arith.constant 1.000000e+00 : f32
    %44 = vector.broadcast %cst_18 : f32 to vector<2x128xf32>
    %45 = arith.maximumf %44, %43 : vector<2x128xf32>
    %46 = vector.broadcast %cst_19 : f32 to vector<2x128xf32>
    %47 = arith.minimumf %46, %45 : vector<2x128xf32>
    %48 = vector.broadcast %3 : f32 to vector<2x128xf32>
    %49 = arith.mulf %13, %48 : vector<2x128xf32>
    %50 = vector.broadcast %16 : f32 to vector<1x1xf32>
    %51 = arith.mulf %30, %50 : vector<1x1xf32>
    %52 = vector.broadcast %51 : vector<1x1xf32> to vector<2x128xf32>
    %53 = arith.addf %49, %52 : vector<2x128xf32>
    %cst_20 = arith.constant 0.000000e+00 : f32
    %cst_21 = arith.constant 1.000000e+00 : f32
    %54 = vector.broadcast %cst_20 : f32 to vector<2x128xf32>
    %55 = arith.maximumf %54, %53 : vector<2x128xf32>
    %56 = vector.broadcast %cst_21 : f32 to vector<2x128xf32>
    %57 = arith.minimumf %56, %55 : vector<2x128xf32>
    %58 = vector.broadcast %3 : f32 to vector<2x128xf32>
    %59 = arith.mulf %15, %58 : vector<2x128xf32>
    %60 = vector.broadcast %16 : f32 to vector<1x1xf32>
    %61 = arith.mulf %37, %60 : vector<1x1xf32>
    %62 = vector.broadcast %61 : vector<1x1xf32> to vector<2x128xf32>
    %63 = arith.addf %59, %62 : vector<2x128xf32>
    %cst_22 = arith.constant 0.000000e+00 : f32
    %cst_23 = arith.constant 1.000000e+00 : f32
    %64 = vector.broadcast %cst_22 : f32 to vector<2x128xf32>
    %65 = arith.maximumf %64, %63 : vector<2x128xf32>
    %66 = vector.broadcast %cst_23 : f32 to vector<2x128xf32>
    %67 = arith.minimumf %66, %65 : vector<2x128xf32>
    %68 = arith.maximumf %47, %57 : vector<2x128xf32>
    %69 = arith.maximumf %68, %67 : vector<2x128xf32>
    %70 = arith.minimumf %47, %57 : vector<2x128xf32>
    %71 = arith.minimumf %70, %67 : vector<2x128xf32>
    %72 = arith.subf %69, %71 : vector<2x128xf32>
    %cst_24 = arith.constant 9.99999993E-9 : f32
    %73 = vector.broadcast %cst_24 : f32 to vector<2x128xf32>
    %74 = arith.addf %72, %73 : vector<2x128xf32>
    %75 = tpu.reciprocal %74 {approx = true} : vector<2x128xf32> -> vector<2x128xf32>
    %76 = arith.subf %57, %67 : vector<2x128xf32>
    %77 = arith.mulf %76, %75 : vector<2x128xf32>
    %cst_25 = arith.constant 0.000000e+00 : f32
    %78 = vector.broadcast %cst_25 : f32 to vector<2x128xf32>
    %79 = arith.cmpf olt, %77, %78 : vector<2x128xf32>
    %cst_26 = arith.constant 6.000000e+00 : f32
    %80 = vector.broadcast %cst_26 : f32 to vector<2x128xf32>
    %81 = arith.addf %77, %80 : vector<2x128xf32>
    %82 = arith.select %79, %81, %77 : vector<2x128xi1>, vector<2x128xf32>
    %83 = arith.subf %67, %47 : vector<2x128xf32>
    %84 = arith.mulf %83, %75 : vector<2x128xf32>
    %cst_27 = arith.constant 2.000000e+00 : f32
    %85 = vector.broadcast %cst_27 : f32 to vector<2x128xf32>
    %86 = arith.addf %84, %85 : vector<2x128xf32>
    %87 = arith.subf %47, %57 : vector<2x128xf32>
    %88 = arith.mulf %87, %75 : vector<2x128xf32>
    %cst_28 = arith.constant 4.000000e+00 : f32
    %89 = vector.broadcast %cst_28 : f32 to vector<2x128xf32>
    %90 = arith.addf %88, %89 : vector<2x128xf32>
    %91 = arith.cmpf oeq, %69, %47 : vector<2x128xf32>
    %cst_29 = arith.constant 0.000000e+00 : f32
    %92 = vector.broadcast %cst_29 : f32 to vector<2x128xf32>
    %93 = arith.select %91, %82, %92 : vector<2x128xi1>, vector<2x128xf32>
    %94 = arith.cmpf oeq, %69, %57 : vector<2x128xf32>
    %95 = arith.select %94, %86, %93 : vector<2x128xi1>, vector<2x128xf32>
    %96 = arith.cmpf oeq, %69, %67 : vector<2x128xf32>
    %97 = arith.select %96, %90, %95 : vector<2x128xi1>, vector<2x128xf32>
    %cst_30 = arith.constant 0.000000e+00 : f32
    %98 = vector.broadcast %cst_30 : f32 to vector<2x128xf32>
    %99 = arith.cmpf oeq, %69, %98 : vector<2x128xf32>
    %cst_31 = arith.constant 0.000000e+00 : f32
    %100 = vector.broadcast %cst_31 : f32 to vector<2x128xf32>
    %101 = arith.select %99, %100, %97 : vector<2x128xi1>, vector<2x128xf32>
    %cst_32 = arith.constant 0.166666672 : f32
    %102 = vector.broadcast %cst_32 : f32 to vector<2x128xf32>
    %103 = arith.mulf %101, %102 : vector<2x128xf32>
    %cst_33 = arith.constant 0.000000e+00 : f32
    %104 = vector.broadcast %cst_33 : f32 to vector<2x128xf32>
    %105 = arith.cmpf oeq, %69, %104 : vector<2x128xf32>
    %cst_34 = arith.constant 9.99999993E-9 : f32
    %106 = vector.broadcast %cst_34 : f32 to vector<2x128xf32>
    %107 = arith.addf %69, %106 : vector<2x128xf32>
    %108 = tpu.reciprocal %107 {approx = true} : vector<2x128xf32> -> vector<2x128xf32>
    %109 = arith.mulf %72, %108 : vector<2x128xf32>
    %cst_35 = arith.constant 0.000000e+00 : f32
    %110 = vector.broadcast %cst_35 : f32 to vector<2x128xf32>
    %111 = arith.select %105, %110, %109 : vector<2x128xi1>, vector<2x128xf32>
    %112 = vector.broadcast %5 : f32 to vector<2x128xf32>
    %113 = arith.mulf %69, %112 : vector<2x128xf32>
    %cst_36 = arith.constant 0.000000e+00 : f32
    %cst_37 = arith.constant 1.000000e+00 : f32
    %114 = vector.broadcast %cst_36 : f32 to vector<2x128xf32>
    %115 = arith.maximumf %114, %113 : vector<2x128xf32>
    %116 = vector.broadcast %cst_37 : f32 to vector<2x128xf32>
    %117 = arith.minimumf %116, %115 : vector<2x128xf32>
    %cst_38 = arith.constant 0.708333313 : f32
    %118 = arith.mulf %7, %cst_38 : f32
    %119 = vector.broadcast %118 : f32 to vector<2x128xf32>
    %120 = arith.addf %103, %119 : vector<2x128xf32>
    %121 = math.floor %120 : vector<2x128xf32>
    %122 = arith.subf %120, %121 : vector<2x128xf32>
    %123 = vector.broadcast %9 : f32 to vector<2x128xf32>
    %124 = arith.mulf %111, %123 : vector<2x128xf32>
    %cst_39 = arith.constant 0.000000e+00 : f32
    %cst_40 = arith.constant 1.000000e+00 : f32
    %125 = vector.broadcast %cst_39 : f32 to vector<2x128xf32>
    %126 = arith.maximumf %125, %124 : vector<2x128xf32>
    %127 = vector.broadcast %cst_40 : f32 to vector<2x128xf32>
    %128 = arith.minimumf %127, %126 : vector<2x128xf32>
    %129 = arith.mulf %117, %128 : vector<2x128xf32>
    %cst_41 = arith.constant 6.000000e+00 : f32
    %130 = vector.broadcast %cst_41 : f32 to vector<2x128xf32>
    %131 = arith.mulf %122, %130 : vector<2x128xf32>
    %cst_42 = arith.constant 5.000000e+00 : f32
    %132 = vector.broadcast %cst_42 : f32 to vector<2x128xf32>
    %133 = arith.addf %132, %131 : vector<2x128xf32>
    %cst_43 = arith.constant 6.000000e+00 : f32
    %134 = vector.broadcast %cst_43 : f32 to vector<2x128xf32>
    %135 = arith.cmpf oge, %133, %134 : vector<2x128xf32>
    %cst_44 = arith.constant 6.000000e+00 : f32
    %136 = vector.broadcast %cst_44 : f32 to vector<2x128xf32>
    %137 = arith.subf %133, %136 : vector<2x128xf32>
    %138 = arith.select %135, %137, %133 : vector<2x128xi1>, vector<2x128xf32>
    %cst_45 = arith.constant 4.000000e+00 : f32
    %139 = vector.broadcast %cst_45 : f32 to vector<2x128xf32>
    %140 = arith.subf %139, %138 : vector<2x128xf32>
    %141 = arith.minimumf %138, %140 : vector<2x128xf32>
    %cst_46 = arith.constant 0.000000e+00 : f32
    %cst_47 = arith.constant 1.000000e+00 : f32
    %142 = vector.broadcast %cst_46 : f32 to vector<2x128xf32>
    %143 = arith.maximumf %142, %141 : vector<2x128xf32>
    %144 = vector.broadcast %cst_47 : f32 to vector<2x128xf32>
    %145 = arith.minimumf %144, %143 : vector<2x128xf32>
    %146 = arith.mulf %129, %145 : vector<2x128xf32>
    %147 = arith.subf %117, %146 : vector<2x128xf32>
    %cst_48 = arith.constant 0.000000e+00 : f32
    %148 = vector.broadcast %cst_48 : f32 to vector<2x128xf32>
    %149 = arith.maximumf %147, %148 : vector<2x128xf32>
    %cst_49 = arith.constant 1.000000e+00 : f32
    %150 = vector.broadcast %cst_49 : f32 to vector<2x128xf32>
    %151 = arith.minimumf %149, %150 : vector<2x128xf32>
    %cst_50 = arith.constant 3.000000e+00 : f32
    %152 = vector.broadcast %cst_50 : f32 to vector<2x128xf32>
    %153 = arith.addf %152, %131 : vector<2x128xf32>
    %cst_51 = arith.constant 6.000000e+00 : f32
    %154 = vector.broadcast %cst_51 : f32 to vector<2x128xf32>
    %155 = arith.cmpf oge, %153, %154 : vector<2x128xf32>
    %cst_52 = arith.constant 6.000000e+00 : f32
    %156 = vector.broadcast %cst_52 : f32 to vector<2x128xf32>
    %157 = arith.subf %153, %156 : vector<2x128xf32>
    %158 = arith.select %155, %157, %153 : vector<2x128xi1>, vector<2x128xf32>
    %cst_53 = arith.constant 4.000000e+00 : f32
    %159 = vector.broadcast %cst_53 : f32 to vector<2x128xf32>
    %160 = arith.subf %159, %158 : vector<2x128xf32>
    %161 = arith.minimumf %158, %160 : vector<2x128xf32>
    %cst_54 = arith.constant 0.000000e+00 : f32
    %cst_55 = arith.constant 1.000000e+00 : f32
    %162 = vector.broadcast %cst_54 : f32 to vector<2x128xf32>
    %163 = arith.maximumf %162, %161 : vector<2x128xf32>
    %164 = vector.broadcast %cst_55 : f32 to vector<2x128xf32>
    %165 = arith.minimumf %164, %163 : vector<2x128xf32>
    %166 = arith.mulf %129, %165 : vector<2x128xf32>
    %167 = arith.subf %117, %166 : vector<2x128xf32>
    %cst_56 = arith.constant 0.000000e+00 : f32
    %168 = vector.broadcast %cst_56 : f32 to vector<2x128xf32>
    %169 = arith.maximumf %167, %168 : vector<2x128xf32>
    %cst_57 = arith.constant 1.000000e+00 : f32
    %170 = vector.broadcast %cst_57 : f32 to vector<2x128xf32>
    %171 = arith.minimumf %169, %170 : vector<2x128xf32>
    %cst_58 = arith.constant 1.000000e+00 : f32
    %172 = vector.broadcast %cst_58 : f32 to vector<2x128xf32>
    %173 = arith.addf %172, %131 : vector<2x128xf32>
    %cst_59 = arith.constant 6.000000e+00 : f32
    %174 = vector.broadcast %cst_59 : f32 to vector<2x128xf32>
    %175 = arith.cmpf oge, %173, %174 : vector<2x128xf32>
    %cst_60 = arith.constant 6.000000e+00 : f32
    %176 = vector.broadcast %cst_60 : f32 to vector<2x128xf32>
    %177 = arith.subf %173, %176 : vector<2x128xf32>
    %178 = arith.select %175, %177, %173 : vector<2x128xi1>, vector<2x128xf32>
    %cst_61 = arith.constant 4.000000e+00 : f32
    %179 = vector.broadcast %cst_61 : f32 to vector<2x128xf32>
    %180 = arith.subf %179, %178 : vector<2x128xf32>
    %181 = arith.minimumf %178, %180 : vector<2x128xf32>
    %cst_62 = arith.constant 0.000000e+00 : f32
    %cst_63 = arith.constant 1.000000e+00 : f32
    %182 = vector.broadcast %cst_62 : f32 to vector<2x128xf32>
    %183 = arith.maximumf %182, %181 : vector<2x128xf32>
    %184 = vector.broadcast %cst_63 : f32 to vector<2x128xf32>
    %185 = arith.minimumf %184, %183 : vector<2x128xf32>
    %186 = arith.mulf %129, %185 : vector<2x128xf32>
    %187 = arith.subf %117, %186 : vector<2x128xf32>
    %cst_64 = arith.constant 0.000000e+00 : f32
    %188 = vector.broadcast %cst_64 : f32 to vector<2x128xf32>
    %189 = arith.maximumf %187, %188 : vector<2x128xf32>
    %cst_65 = arith.constant 1.000000e+00 : f32
    %190 = vector.broadcast %cst_65 : f32 to vector<2x128xf32>
    %191 = arith.minimumf %189, %190 : vector<2x128xf32>
    %c0_66 = arith.constant 0 : index
    %c0_67 = arith.constant 0 : index
    %c0_68 = arith.constant 0 : index
    %c0_69 = arith.constant 0 : index
    %192 = vector.load %arg3[%c0_66, %c0_67, %c0_68, %c0_69] : memref<1x3x2x128xf32, #tpu.memory_space<vmem>>, vector<1x1x2x128xf32>
    %193 = vector.shape_cast %192 : vector<1x1x2x128xf32> to vector<2x128xf32>
    %194 = vector.shape_cast %151 : vector<2x128xf32> to vector<1x1x2x128xf32>
    tpu.vector_store %arg3[%c0_66, %c0_67, %c0_68, %c0_69], %194 {strides = array<i32>} : memref<1x3x2x128xf32, #tpu.memory_space<vmem>>, vector<1x1x2x128xf32>,
    %c0_70 = arith.constant 0 : index
    %c1_71 = arith.constant 1 : index
    %c0_72 = arith.constant 0 : index
    %c0_73 = arith.constant 0 : index
    %195 = vector.load %arg3[%c0_70, %c1_71, %c0_72, %c0_73] : memref<1x3x2x128xf32, #tpu.memory_space<vmem>>, vector<1x1x2x128xf32>
    %196 = vector.shape_cast %195 : vector<1x1x2x128xf32> to vector<2x128xf32>
    %197 = vector.shape_cast %171 : vector<2x128xf32> to vector<1x1x2x128xf32>
    tpu.vector_store %arg3[%c0_70, %c1_71, %c0_72, %c0_73], %197 {strides = array<i32>} : memref<1x3x2x128xf32, #tpu.memory_space<vmem>>, vector<1x1x2x128xf32>,
    %c0_74 = arith.constant 0 : index
    %c2_75 = arith.constant 2 : index
    %c0_76 = arith.constant 0 : index
    %c0_77 = arith.constant 0 : index
    %198 = vector.load %arg3[%c0_74, %c2_75, %c0_76, %c0_77] : memref<1x3x2x128xf32, #tpu.memory_space<vmem>>, vector<1x1x2x128xf32>
    %199 = vector.shape_cast %198 : vector<1x1x2x128xf32> to vector<2x128xf32>
    %200 = vector.shape_cast %191 : vector<2x128xf32> to vector<1x1x2x128xf32>
    tpu.vector_store %arg3[%c0_74, %c2_75, %c0_76, %c0_77], %200 {strides = array<i32>} : memref<1x3x2x128xf32, #tpu.memory_space<vmem>>, vector<1x1x2x128xf32>,
    return
  }
  func.func @transform_0(%arg0: i32) -> (i32, i32) {
    %c0_i32 = arith.constant 0 : i32
    %c0_i32_0 = arith.constant 0 : i32
    %c0_i32_1 = arith.constant 0 : i32
    return %c0_i32, %c0_i32_0 : i32, i32
  }
  func.func @transform_1(%arg0: i32) -> (i32, i32, i32, i32) {
    %c0_i32 = arith.constant 0 : i32
    %c0_i32_0 = arith.constant 0 : i32
    %c0_i32_1 = arith.constant 0 : i32
    %c0_i32_2 = arith.constant 0 : i32
    return %arg0, %c0_i32, %c0_i32_0, %c0_i32_1 : i32, i32, i32, i32
  }
  func.func @transform_2(%arg0: i32) -> (i32, i32, i32, i32) {
    %c0_i32 = arith.constant 0 : i32
    %c0_i32_0 = arith.constant 0 : i32
    %c0_i32_1 = arith.constant 0 : i32
    %c0_i32_2 = arith.constant 0 : i32
    return %arg0, %c0_i32, %c0_i32_0, %c0_i32_1 : i32, i32, i32, i32
  }
}

</mosaic_0001>

<llo_original>
// kernel: tpu_custom_call.1
$region0: #{tpu_custom_call.1}
  #allocation0 [shape = 'u32[]', space=smem, size = 0x4, offset = 0x4, fixed_abs, tag = 'smem constant byte address 0x4 - core index']
  #allocation1 [shape = 'u32[144,128]{1,0:T(1,128)}', space=vmem, size = 0x12000, scoped, tag = 'internal scratch']
  %s0 = inlined_call_operand.vmem [shape: f32[4,2], index: 0, kind: input, shape index: {}]
  %s1 = inlined_call_operand.hbm [shape: f32[2,3,2,128], index: 1, kind: input, shape index: {}]
  %s2 = inlined_call_operand.hbm [shape: f32[2,3,2,128], index: 2, kind: output, shape index: {}]
  %s3 = sld [smem:[#allocation0]]
  $region49: #{tpu_custom_call.1} parent=0
    _
  %s5 = ssub.s32 1, %s3
  %s6 = scalar_select 0, %s5, %s3
  $region1: #{tpu_custom_call.1} parent=0
    #allocation2 [shape = 'u8[2048]{0}', space=smem, size = 0x800, scoped, tag = 'input window, operand 0, single buffered']
    #allocation3 [shape = 's32[2]{0}', space=sflag, size = 0x8, scoped, tag = 'scoped memory for tpu_custom_call.1']
    #allocation4 [shape = 's32[2]{0}', space=sflag, size = 0x8, scoped, tag = 'scoped memory for tpu_custom_call.1']
    #allocation5 [shape = 's32[2]{0}', space=sflag, size = 0x8, scoped, tag = 'scoped memory for tpu_custom_call.1']
    #allocation6 [shape = 'u8[6144]{0}', space=vmem, size = 0x1800, scoped, tag = 'input window, operand 1']
    #allocation7 [shape = 'u8[6144]{0}', space=vmem, size = 0x1800, scoped, tag = 'output window, operand 0']
    %7 = vsyncpa [#allocation5], 0
    %8 = vsyncpa [#allocation3], 0
    %s9 = scalar_lea.sflag [#allocation3], 1
    %10 = vsyncpa %s9, 0
    %11 = vsyncpa [#allocation4], 0
    %s12 = scalar_lea.sflag [#allocation4], 1
    %13 = vsyncpa %s12, 0
    loop: start=0, step=1, limit=4
    $region2: #{tpu_custom_call.1} parent=1 // loop_pre_header
      _
    $region3: #{tpu_custom_call.1} parent=1 // loop_header
      %s15 = sphi 0, %s19
      %p16 = scmp.ge.s32.totalorder %s15, 4
      %s23 = sphi 0, %s23
      %s25 = sphi 0, %s23
      %s26 = sphi 0, %s25
      %s40 = sphi 0, %s26
      %s46 = sphi 0, %s48
      %s49 = sphi 0, %s46
      %s50 = sphi 0, %s49
      %s66 = sphi 0, %s50
      %s72 = sphi 0, %s74
      %s75 = sphi 0, %s72
      %s76 = sphi 0, %s75
      %s92 = sphi 0, %s76
    $region4: #{tpu_custom_call.1} parent=1 // loop_header_branch
      %18 = sbr.rel (%p16) target = $region8
    $region5: #{tpu_custom_call.1} parent=1 // loop_body
      %s20 = ssub.s32 %s15, 1
      %s21 = ssub.s32 %s15, 2
      %s22 = sadd.s32 %s15, 1
      %s24 = sadd.s32 %s23, 1
      %p27 = scmp.eq.s32.totalorder %s15, 1
      %p28 = scmp.ne.s32.totalorder %s23, %s25
      %p29 = scmp.eq.s32.totalorder %s15, 0
      %p30 = por %p28, %p29
      %p31 = scmp.ne.s32.totalorder %s23, %s25
      %p32 = scmp.eq.s32.totalorder %s20, 1
      %p33 = por %p31, %p32
      %p34 = scmp.ne.s32.totalorder %s25, %s26
      %p35 = scmp.eq.s32.totalorder %s20, 0
      %p36 = por %p34, %p35
      %p37 = scmp.ne.s32.totalorder %s25, %s26
      %p38 = scmp.eq.s32.totalorder %s21, 1
      %p39 = por %p37, %p38
      %p41 = scmp.ne.s32.totalorder %s26, %s40
      %p42 = scmp.eq.s32.totalorder %s21, 0
      %p43 = por %p41, %p42
      %s44 = ssub.s32 %s15, %s22
      %p45 = scmp.eq.s32.totalorder %s44, 0
      %s47 = sadd.s32 %s46, 1
      %s48 = scalar_select %p45, %s46, %s47
      %p51 = pneg %p45
      %p52 = scmp.eq.s32.totalorder %s15, 1
      %p53 = por %p51, %p52
      %p54 = scmp.ne.s32.totalorder %s46, %s49
      %p55 = scmp.eq.s32.totalorder %s15, 0
      %p56 = por %p54, %p55
      %p57 = scmp.ne.s32.totalorder %s46, %s49
      %p58 = scmp.eq.s32.totalorder %s20, 1
      %p59 = por %p57, %p58
      %p60 = scmp.ne.s32.totalorder %s49, %s50
      %p61 = scmp.eq.s32.totalorder %s20, 0
      %p62 = por %p60, %p61
      %p63 = scmp.ne.s32.totalorder %s49, %s50
      %p64 = scmp.eq.s32.totalorder %s21, 1
      %p65 = por %p63, %p64
      %p67 = scmp.ne.s32.totalorder %s50, %s66
      %p68 = scmp.eq.s32.totalorder %s21, 0
      %p69 = por %p67, %p68
      %s70 = ssub.s32 %s15, %s22
      %p71 = scmp.eq.s32.totalorder %s70, 0
      %s73 = sadd.s32 %s72, 1
      %s74 = scalar_select %p71, %s72, %s73
      %p77 = pneg %p71
      %p78 = scmp.eq.s32.totalorder %s15, 1
      %p79 = por %p77, %p78
      %p80 = scmp.ne.s32.totalorder %s72, %s75
      %p81 = scmp.eq.s32.totalorder %s15, 0
      %p82 = por %p80, %p81
      %p83 = scmp.ne.s32.totalorder %s72, %s75
      %p84 = scmp.eq.s32.totalorder %s20, 1
      %p85 = por %p83, %p84
      %p86 = scmp.ne.s32.totalorder %s75, %s76
      %p87 = scmp.eq.s32.totalorder %s20, 0
      %p88 = por %p86, %p87
      %p89 = scmp.ne.s32.totalorder %s75, %s76
      %p90 = scmp.eq.s32.totalorder %s21, 1
      %p91 = por %p89, %p90
      %p93 = scmp.ne.s32.totalorder %s76, %s92
      %p94 = scmp.eq.s32.totalorder %s21, 0
      %p95 = por %p93, %p94
      %p96 = scmp.le.s32.totalorder 1, %s15
      %p97 = scmp.lt.s32.totalorder %s15, 3
      %p98 = pnand %p96, %p97
      %p99 = pneg %p98
      // Predicated region
      $region9: #{tpu_custom_call.1} parent=5 // pred_check
        _
      $region10: #{tpu_custom_call.1} parent=5 // pred_check_branch
        %101 = sbr.rel (%p98) target = $region12
      $region11: #{tpu_custom_call.1} parent=5 // pred_region
        %s102 = ssub.s32 %s15, 1
        // Predicated region
        $region13: #{tpu_custom_call.1} parent=11 // pred_check
          %p103 = pneg %p36
        $region14: #{tpu_custom_call.1} parent=11 // pred_check_branch
          %105 = sbr.rel (%p103) target = $region16
        $region15: #{tpu_custom_call.1} parent=11 // pred_region
          %s107 = ssub.s32 64, 64
          %108 = vsyncadd [#allocation5], %s107
          %s110 = sshll.u32 %s0, 4
          %s111 = int_to_ptr.vmem [resolvable:$true] %s110
          %113 = dma.vmem_to_smem %s111, 64, [#allocation2], [#allocation5]
        $region16: #{tpu_custom_call.1} parent=11 // pred_fallthru
          _
      $region12: #{tpu_custom_call.1} parent=5 // pred_fallthru
        _
      %p114 = scmp.lt.s32.totalorder %s15, 2
      // Predicated region
      $region17: #{tpu_custom_call.1} parent=5 // pred_check
        %p115 = pneg %p114
      $region18: #{tpu_custom_call.1} parent=5 // pred_check_branch
        %117 = sbr.rel (%p115) target = $region20
      $region19: #{tpu_custom_call.1} parent=5 // pred_region
        // Predicated region
        $region21: #{tpu_custom_call.1} parent=19 // pred_check
          %p118 = pneg %p56
        $region22: #{tpu_custom_call.1} parent=19 // pred_check_branch
          %120 = sbr.rel (%p118) target = $region24
        $region23: #{tpu_custom_call.1} parent=19 // pred_region
          %s121 = sand.u32 %s46, 1
          %s122 = scalar_lea.sflag [#allocation3], %s121
          %s123 = sand.u32 %s46, 1
          %s124 = smul.addr %s123, 6
          %s125 = scalar_lea.vmem [#allocation6], %s124
          %s127 = ssub.s32 96, 96
          %128 = vsyncadd %s122, %s127
          %s129 = smul.addr %s15, 3
          %s130 = smul.addr %s129, 32
          %s131 = scalar_lea.hbm %s1, %s130
          %s132 = sshll.u32 %s125, 4
          %s133 = int_to_ptr.vmem [resolvable:$true] %s132
          %138 = dma.hbm_to_vmem [thread:$0]  %s131, 96, %s133, %s122, 32, 32, 2
        $region24: #{tpu_custom_call.1} parent=19 // pred_fallthru
          _
      $region20: #{tpu_custom_call.1} parent=5 // pred_fallthru
        _
      %p139 = scmp.le.s32.totalorder 1, %s15
      %p140 = scmp.lt.s32.totalorder %s15, 3
      %p141 = pnand %p139, %p140
      %p142 = pneg %p141
      // Predicated region
      $region25: #{tpu_custom_call.1} parent=5 // pred_check
        _
      $region26: #{tpu_custom_call.1} parent=5 // pred_check_branch
        %144 = sbr.rel (%p141) target = $region28
      $region27: #{tpu_custom_call.1} parent=5 // pred_region
        %s145 = ssub.s32 %s15, 1
        // Predicated region
        $region29: #{tpu_custom_call.1} parent=27 // pred_check
          %p146 = pneg %p36
        $region30: #{tpu_custom_call.1} parent=27 // pred_check_branch
          %148 = sbr.rel (%p146) target = $region32
        $region31: #{tpu_custom_call.1} parent=27 // pred_region
          %149 = dma.done [#allocation5], 64
        $region32: #{tpu_custom_call.1} parent=27 // pred_fallthru
          _
        %s150 = sand.u32 %s49, 1
        %s151 = scalar_lea.sflag [#allocation3], %s150
        %s152 = sand.u32 %s49, 1
        %s153 = smul.addr %s152, 6
        %s154 = scalar_lea.vmem [#allocation6], %s153
        // Predicated region
        $region33: #{tpu_custom_call.1} parent=27 // pred_check
          %p155 = pneg %p62
        $region34: #{tpu_custom_call.1} parent=27 // pred_check_branch
          %157 = sbr.rel (%p155) target = $region36
        $region35: #{tpu_custom_call.1} parent=27 // pred_region
          %158 = dma.done %s151, 96
        $region36: #{tpu_custom_call.1} parent=27 // pred_fallthru
          _
        %159 = sfence
        %p160 = pneg %p36
        %p161 = pneg %p33
        %s162 = sand.u32 %s49, 1
        %s163 = scalar_lea.sflag [#allocation3], %s162
        %s164 = sand.u32 %s49, 1
        %s165 = smul.addr %s164, 6
        %s166 = scalar_lea.vmem [#allocation6], %s165
        %p167 = pneg %p62
        %p168 = pneg %p59
        %p169 = pneg %p88
        %p170 = pneg %p85
        %s171 = sand.u32 %s75, 1
        %s172 = scalar_lea.sflag [#allocation4], %s171
        %s173 = sand.u32 %s75, 1
        %s174 = smul.addr %s173, 6
        %s175 = scalar_lea.vmem [#allocation7], %s174
        %s176 = sld [smem:[#allocation2 + %s20]]
        %s177 = sshra.s32 %s20, 7
        %s178 = sand.u32 %s20, 127
        %s179 = sadd.s32 %s177, 1
        %s180 = smul.u32 %s179, 128
        %s181 = sshra.s32 %s20, 7
        %s182 = sand.u32 %s20, 127
        %s183 = sadd.s32 %s180, %s182
        %s184 = sld [smem:[#allocation2 + %s183]]
        %s185 = sadd.s32 %s177, 2
        %s186 = smul.u32 %s185, 128
        %s187 = sadd.s32 %s186, %s182
        %s188 = sld [smem:[#allocation2 + %s187]]
        %s189 = sadd.s32 %s177, 3
        %s190 = smul.u32 %s189, 128
        %s191 = sadd.s32 %s190, %s182
        %s192 = sld [smem:[#allocation2 + %s191]]
        %v193 = vld [vmem:[%s154] sm:$0x3]
        %s194 = scalar_lea.vmem %s154, 2 [#allocation6]
        %v195 = vld [vmem:[%s194] sm:$0x3]
        %s196 = scalar_lea.vmem %s154, 4 [#allocation6]
        %v197 = vld [vmem:[%s196] sm:$0x3]
        %s198 = ssub.f32 1.0, %s176
        %vm199 = vcmask 1041408
        %v200 = vsel %vm199, %v193, 0.0
        %201 = vadd.xlane.f32.xlu0 %v200
        %v202 = vpop.xlane.xlu0 %201
        %v203 = vrot.slane %v202, 4
        %v204 = vadd.f32 %v202, %v203
        %v205 = vrot.slane %v204, 2
        %v206 = vadd.f32 %v204, %v205
        %v207 = vrot.slane %v206, 1
        %v208 = vadd.f32 %v206, %v207
        %s209 = vtos %v208
        %v210 = vstv %s209
        %v211 = vmul.f32 %v210, 0.00390625
        %v212 = vsel %vm199, %v195, 0.0
        %213 = vadd.xlane.f32.xlu0 %v212
        %v214 = vpop.xlane.xlu0 %213
        %v215 = vrot.slane %v214, 4
        %v216 = vadd.f32 %v214, %v215
        %v217 = vrot.slane %v216, 2
        %v218 = vadd.f32 %v216, %v217
        %v219 = vrot.slane %v218, 1
        %v220 = vadd.f32 %v218, %v219
        %s221 = vtos %v220
        %v222 = vstv %s221
        %v223 = vmul.f32 %v222, 0.00390625
        %v224 = vsel %vm199, %v197, 0.0
        %225 = vadd.xlane.f32.xlu0 %v224
        %v226 = vpop.xlane.xlu0 %225
        %v227 = vrot.slane %v226, 4
        %v228 = vadd.f32 %v226, %v227
        %v229 = vrot.slane %v228, 2
        %v230 = vadd.f32 %v228, %v229
        %v231 = vrot.slane %v230, 1
        %v232 = vadd.f32 %v230, %v231
        %s233 = vtos %v232
        %v234 = vstv %s233
        %v235 = vmul.f32 %v234, 0.00390625
        %v236 = vstv %s176
        %v237 = vmul.f32 %v193, %v236
        %v238 = vstv %s198
        %v239 = vmul.f32 %v211, %v238
        %v240 = vadd.f32 %v237, %v239
        %v241 = vmax.f32 %v240, 0.0
        %v242 = vmin.f32 %v241, 1.0
        %v243 = vmul.f32 %v195, %v236
        %v244 = vmul.f32 %v223, %v238
        %v245 = vadd.f32 %v243, %v244
        %v246 = vmax.f32 %v245, 0.0
        %v247 = vmin.f32 %v246, 1.0
        %v248 = vmul.f32 %v197, %v236
        %v249 = vmul.f32 %v235, %v238
        %v250 = vadd.f32 %v248, %v249
        %v251 = vmax.f32 %v250, 0.0
        %v252 = vmin.f32 %v251, 1.0
        %v253 = vmax.f32 %v242, %v247
        %v254 = vmax.f32 %v253, %v252
        %v255 = vmin.f32 %v242, %v247
        %v256 = vmin.f32 %v255, %v252
        %v257 = vsub.f32 %v254, %v256
        %v258 = vadd.f32 %v257, 1e-08
        %v259 = vrcp.pop %v258
        %v260 = vsub.f32 %v247, %v252
        %v261 = vmul.f32 %v260, %v259
        %vm262 = vcmp.lt.f32.partialorder %v261, 0.0
        %v263 = vadd.f32 %v261, 6.0
        %v264 = vsel %vm262, %v263, %v261
        %v265 = vsub.f32 %v252, %v242
        %v266 = vmul.f32 %v265, %v259
        %v267 = vadd.f32 %v266, 2.0
        %v268 = vsub.f32 %v242, %v247
        %v269 = vmul.f32 %v268, %v259
        %v270 = vadd.f32 %v269, 4.0
        %vm271 = vcmp.eq.f32.partialorder %v254, %v242
        %v272 = vsel %vm271, %v264, 0.0
        %vm273 = vcmp.eq.f32.partialorder %v254, %v247
        %v274 = vsel %vm273, %v267, %v272
        %vm275 = vcmp.eq.f32.partialorder %v254, %v252
        %v276 = vsel %vm275, %v270, %v274
        %vm277 = vcmp.eq.f32.partialorder %v254, 0.0
        %v278 = vsel %vm277, 0.0, %v276
        %v279 = vmul.f32 %v278, 0.16666667
        %v280 = vadd.f32 %v254, 1e-08
        %v281 = vrcp.pop %v280
        %v282 = vmul.f32 %v257, %v281
        %v283 = vsel %vm277, 0.0, %v282
        %v284 = vstv %s184
        %v285 = vmul.f32 %v254, %v284
        %v286 = vmax.f32 %v285, 0.0
        %v287 = vmin.f32 %v286, 1.0
        %s288 = smul.f32 %s188, 0.7083333
        %v289 = vstv %s288
        %v290 = vadd.f32 %v279, %v289
        %v291 = vfloor.f32 %v290
        %v292 = vsub.f32 %v290, %v291
        %v293 = vstv %s192
        %v294 = vmul.f32 %v283, %v293
        %v295 = vmax.f32 %v294, 0.0
        %v296 = vmin.f32 %v295, 1.0
        %v297 = vmul.f32 %v287, %v296
        %v298 = vmul.f32 %v292, 6.0
        %v299 = vadd.f32 %v298, 5.0
        %vm300 = vcmp.ge.f32.partialorder %v299, 6.0
        %v301 = vsub.f32 %v299, 6.0
        %v302 = vsel %vm300, %v301, %v299
        %v303 = vsub.f32 4.0, %v302
        %v304 = vmin.f32 %v302, %v303
        %v305 = vmax.f32 %v304, 0.0
        %v306 = vmin.f32 %v305, 1.0
        %v307 = vmul.f32 %v297, %v306
        %v308 = vsub.f32 %v287, %v307
        %v309 = vmax.f32 %v308, 0.0
        %v310 = vmin.f32 %v309, 1.0
        %v311 = vadd.f32 %v298, 3.0
        %vm312 = vcmp.ge.f32.partialorder %v311, 6.0
        %v313 = vsub.f32 %v311, 6.0
        %v314 = vsel %vm312, %v313, %v311
        %v315 = vsub.f32 4.0, %v314
        %v316 = vmin.f32 %v314, %v315
        %v317 = vmax.f32 %v316, 0.0
        %v318 = vmin.f32 %v317, 1.0
        %v319 = vmul.f32 %v297, %v318
        %v320 = vsub.f32 %v287, %v319
        %v321 = vmax.f32 %v320, 0.0
        %v322 = vmin.f32 %v321, 1.0
        %v323 = vadd.f32 %v298, 1.0
        %vm324 = vcmp.ge.f32.partialorder %v323, 6.0
        %v325 = vsub.f32 %v323, 6.0
        %v326 = vsel %vm324, %v325, %v323
        %v327 = vsub.f32 4.0, %v326
        %v328 = vmin.f32 %v326, %v327
        %v329 = vmax.f32 %v328, 0.0
        %v330 = vmin.f32 %v329, 1.0
        %v331 = vmul.f32 %v297, %v330
        %v332 = vsub.f32 %v287, %v331
        %v333 = vmax.f32 %v332, 0.0
        %v334 = vmin.f32 %v333, 1.0
        %335 = vst [vmem:[%s175] sm:$0x3] %v310
        %s336 = scalar_lea.vmem %s175, 2 [#allocation7]
        %337 = vst [vmem:[%s336] sm:$0x3] %v322
        %s338 = scalar_lea.vmem %s175, 4 [#allocation7]
        %339 = vst [vmem:[%s338] sm:$0x3] %v334
        %s340 = sand.u32 %s75, 1
        %s341 = scalar_lea.sflag [#allocation4], %s340
        %s342 = sand.u32 %s75, 1
        %s343 = smul.addr %s342, 6
        %s344 = scalar_lea.vmem [#allocation7], %s343
        // Predicated region
        $region37: #{tpu_custom_call.1} parent=27 // pred_check
          %p345 = pneg %p85
        $region38: #{tpu_custom_call.1} parent=27 // pred_check_branch
          %347 = sbr.rel (%p345) target = $region40
        $region39: #{tpu_custom_call.1} parent=27 // pred_region
          %s349 = ssub.s32 96, 96
          %350 = vsyncadd %s341, %s349
          %s351 = smul.addr %s20, 3
          %s352 = smul.addr %s351, 32
          %s353 = scalar_lea.hbm %s2, %s352
          %s354 = sshll.u32 %s344, 4
          %s355 = int_to_ptr.vmem [resolvable:$true] %s354
          %360 = dma.vmem_to_hbm [thread:$0]  %s355, 96, %s353, %s341, 32, 32, 2
        $region40: #{tpu_custom_call.1} parent=27 // pred_fallthru
          _
      $region28: #{tpu_custom_call.1} parent=5 // pred_fallthru
        _
      %p361 = scmp.le.s32.totalorder 2, %s15
      // Predicated region
      $region41: #{tpu_custom_call.1} parent=5 // pred_check
        %p362 = pneg %p361
      $region42: #{tpu_custom_call.1} parent=5 // pred_check_branch
        %364 = sbr.rel (%p362) target = $region44
      $region43: #{tpu_custom_call.1} parent=5 // pred_region
        %s365 = ssub.s32 %s15, 2
        // Predicated region
        $region45: #{tpu_custom_call.1} parent=43 // pred_check
          %p366 = pneg %p91
        $region46: #{tpu_custom_call.1} parent=43 // pred_check_branch
          %368 = sbr.rel (%p366) target = $region48
        $region47: #{tpu_custom_call.1} parent=43 // pred_region
          %s369 = sand.u32 %s76, 1
          %s370 = scalar_lea.sflag [#allocation4], %s369
          %s371 = sand.u32 %s76, 1
          %s372 = smul.addr %s371, 6
          %s373 = scalar_lea.vmem [#allocation7], %s372
          %374 = dma.done %s370, 96
        $region48: #{tpu_custom_call.1} parent=43 // pred_fallthru
          _
      $region44: #{tpu_custom_call.1} parent=5 // pred_fallthru
        _
    $region6: #{tpu_custom_call.1} parent=1 // loop_footer
      %s19 = sadd.s32 1, %s15
    $region7: #{tpu_custom_call.1} parent=1 // loop_footer_branch
      %14 = sbr.rel target = $region3
    $region8: #{tpu_custom_call.1} parent=1 // loop_exit
      _
    %375 = vsyncpa [#allocation3], 1
    %s376 = scalar_lea.sflag [#allocation3], 1
    %377 = vsyncpa %s376, 1
    %378 = vsyncpa [#allocation4], 1
    %s379 = scalar_lea.sflag [#allocation4], 1
    %380 = vsyncpa %s379, 1
    %381 = vsyncpa [#allocation5], 1
    %s382 = scalar_lea.sflag [#allocation5], 1
    %383 = vsyncpa %s382, 1

</llo_original>
